<compile_context>
chip_gen: v6e
topology: v6e:2x2x1
jax: 0.10.0
libtpu: 0.0.40
codegen_flags: <defaults>
</compile_context>

<pallas_src>
import functools

import jax
import jax.numpy as jnp
from jax import lax
from jax.experimental import pallas as pl
from jax.experimental.pallas import tpu as pltpu

NEG_SLOPE = 0.01
_LANES = 128
_CHUNK_ROWS = 8                      # one (8, 128) f32 vreg per chunk
_UNROLL = 4                          # manual unroll of the chunk loop
_ROW_ALIGN = _CHUNK_ROWS * _UNROLL   # 32


def _leaky(v):
    # max(v, 0.01*v): identical to leaky_relu for all finite inputs.
    return jnp.maximum(v, NEG_SLOPE * v)


def _round_up(a, m):
    return ((a + m - 1) // m) * m


def _mlp_kernel(x_ref, w1_ref, b1_ref, w2_ref, b2_ref, o_ref):
    rows = x_ref.shape[0]            # static block row count (multiple of 32)

    # ---- per-grid-step constants (hoisted out of the chunk loop) ----------
    lane = lax.broadcasted_iota(jnp.int32, (_CHUNK_ROWS, _LANES), 1)
    even = (lane & 1) == 0                      # feature-0 lanes
    partner_f = (lane ^ 1).astype(jnp.float32)  # lane of the paired feature
    lane_f = lane.astype(jnp.float32)

    # Pair-swap (x[l] <-> x[l^1]) robust to the rotate-direction convention:
    # the mask is computed from the same roll call it gates.
    use_p1 = pltpu.roll(lane_f, 1, axis=1) == partner_f

    def pair_swap(t):
        return jnp.where(use_p1,
                         pltpu.roll(t, 1, axis=1),
                         pltpu.roll(t, _LANES - 1, axis=1))

    def sel(a, b):                   # parity-dependent scalar splat
        return jnp.where(even, a, b)

    # fc1, parity-multiplexed: hh_j holds h_j on even lanes, h_{j+4} on odd.
    a1 = [sel(w1_ref[j, 0], w1_ref[j + 4, 1]) for j in range(4)]  # * x_self
    a2 = [sel(w1_ref[j, 1], w1_ref[j + 4, 0]) for j in range(4)]  # * x_partner
    a0 = [sel(b1_ref[j], b1_ref[j + 4]) for j in range(4)]
    # fc2: y = sum_j alpha_j*hh_j + pair_swap(sum_j beta_j*hh_j) + bias
    alpha = [sel(w2_ref[0, j], w2_ref[1, j + 4]) for j in range(4)]
    beta = [sel(w2_ref[1, j], w2_ref[0, j + 4]) for j in range(4)]
    bias2 = sel(b2_ref[0], b2_ref[1])

    def chunk(row0):
        xv = x_ref[pl.ds(row0, _CHUNK_ROWS), :]
        xs = pair_swap(xv)
        u = bias2
        v = None
        for j in range(4):
            hh = _leaky(a1[j] * xv + a2[j] * xs + a0[j])
            u = u + alpha[j] * hh
            v = beta[j] * hh if v is None else v + beta[j] * hh
        y = _leaky(u + pair_swap(v))
        o_ref[pl.ds(row0, _CHUNK_ROWS), :] = y.astype(o_ref.dtype)

    def body(i, carry):
        base = pl.multiple_of(i * _ROW_ALIGN, _ROW_ALIGN)
        for k in range(_UNROLL):     # manual unroll keeps hh in vregs
            chunk(base + k * _CHUNK_ROWS)
        return carry

    lax.fori_loop(0, rows // _ROW_ALIGN, body, 0)


@functools.partial(jax.jit, static_argnames=("block_rows",))
def block_forward(x, w1, b1, w2, b2, *, block_rows=2048):
    """Forward pass of `block` for x of shape (B, 2); returns (B, 2).

    w1: (8, 2), b1: (8,), w2: (2, 8), b2: (2,)  -- PyTorch nn.Linear layout.
    """
    B = x.shape[0]
    n_elems = 2 * B
    rows = pl.cdiv(n_elems, _LANES)

    block_rows = max(_ROW_ALIGN, _round_up(block_rows, _ROW_ALIGN))
    # Prefer >=2 grid steps (v7x dual TensorCore) while capping the block so
    # pipelined in+out buffers stay ~4 MiB of VMEM.
    tr = min(block_rows,
             max(_ROW_ALIGN, _round_up(pl.cdiv(rows, 2), _ROW_ALIGN)))
    rows_p = _round_up(rows, tr)

    flat = x.reshape(-1)                       # free (contiguous view)
    padded = rows_p * _LANES != n_elems
    if padded:                                  # ragged sizes only
        flat = jnp.pad(flat, (0, rows_p * _LANES - n_elems))
    xg = flat.reshape(rows_p, _LANES)           # free

    out_g = pl.pallas_call(
        _mlp_kernel,
        out_shape=jax.ShapeDtypeStruct((rows_p, _LANES), x.dtype),
        grid=(rows_p // tr,),
        in_specs=[
            pl.BlockSpec((tr, _LANES), lambda i: (i, 0)),          # x stream
            pl.BlockSpec(memory_space=pltpu.MemorySpace.SMEM),     # w1 (8,2)
            pl.BlockSpec(memory_space=pltpu.MemorySpace.SMEM),     # b1 (8,)
            pl.BlockSpec(memory_space=pltpu.MemorySpace.SMEM),     # w2 (2,8)
            pl.BlockSpec(memory_space=pltpu.MemorySpace.SMEM),     # b2 (2,)
        ],
        out_specs=pl.BlockSpec((tr, _LANES), lambda i: (i, 0)),    # lane-dense
        compiler_params=pltpu.CompilerParams(
            dimension_semantics=("parallel",),
        ),
    )(xg, w1, b1, w2, b2)

    out_flat = out_g.reshape(-1)
    if padded:
        out_flat = out_flat[:n_elems]
    return out_flat.reshape(B, 2)


def init_params(key):
    """PyTorch-style init (U(-1/sqrt(fan_in), 1/sqrt(fan_in))), nn.Linear layout."""
    k1, k2, k3, k4 = jax.random.split(key, 4)
    bound1 = 1.0 / jnp.sqrt(2.0)
    bound2 = 1.0 / jnp.sqrt(8.0)
    w1 = jax.random.uniform(k1, (8, 2), jnp.float32, -bound1, bound1)
    b1 = jax.random.uniform(k2, (8,), jnp.float32, -bound1, bound1)
    w2 = jax.random.uniform(k3, (2, 8), jnp.float32, -bound2, bound2)
    b2 = jax.random.uniform(k4, (2,), jnp.float32, -bound2, bound2)
    return w1, b1, w2, b2


def reference_forward(x, w1, b1, w2, b2):
    def leaky(v):
        return jnp.where(v > 0, v, NEG_SLOPE * v)
    h = leaky(x @ w1.T + b1)
    return leaky(h @ w2.T + b2)


if __name__ == "__main__":
    key = jax.random.PRNGKey(0)
    kx, kp = jax.random.split(key)
    w1, b1, w2, b2 = init_params(kp)

    # Lane-aligned batch exercising the multi-step (2-block) grid, no padding.
    B = 4096
    x = jax.random.normal(kx, (B, 2), jnp.float32)
    out = jax.block_until_ready(block_forward(x, w1, b1, w2, b2))
    ref = reference_forward(x, w1, b1, w2, b2)
    assert out.shape == (B, 2), out.shape
    assert jnp.allclose(out, ref, atol=1e-5, rtol=1e-5)

    # Ragged, non-lane-aligned batch (padding path).
    x_small = x[:10]
    out_small = jax.block_until_ready(block_forward(x_small, w1, b1, w2, b2))
    ref_small = reference_forward(x_small, w1, b1, w2, b2)
    assert out_small.shape == (10, 2), out_small.shape
    assert jnp.allclose(out_small, ref_small, atol=1e-5, rtol=1e-5)

    print("KERNEL_OK")
</pallas_src>

<mosaic_0001>
module attributes {stable_mosaic.version = 11 : i64} {
  func.func @_mlp_kernel(%arg0: i32, %arg1: memref<32x128xf32, #tpu.memory_space<vmem>>, %arg2: memref<8x2xf32, #tpu.memory_space<smem>>, %arg3: memref<8xf32, #tpu.memory_space<smem>>, %arg4: memref<2x8xf32, #tpu.memory_space<smem>>, %arg5: memref<2xf32, #tpu.memory_space<smem>>, %arg6: memref<32x128xf32, #tpu.memory_space<vmem>>) attributes {dimension_semantics = [#tpu.dimension_semantics<parallel>], iteration_bounds = array<i64: 2>, scalar_prefetch = 0 : i64, scratch_operands = 0 : i64, tpu.core_type = #tpu.core_type<tc>, window_params = [{transform_indices = @transform_0, window_bounds = array<i64: 32, 128>}, {transform_indices = @transform_1, window_bounds = array<i64: 8, 2>}, {transform_indices = @transform_2, window_bounds = array<i64: 8>}, {transform_indices = @transform_3, window_bounds = array<i64: 2, 8>}, {transform_indices = @transform_4, window_bounds = array<i64: 2>}, {transform_indices = @transform_5, window_bounds = array<i64: 32, 128>}]} {
    %0 = tpu.iota {dimensions = array<i32: 1>} : vector<8x128xi32>
    %c1_i32 = arith.constant 1 : i32
    %1 = vector.broadcast %c1_i32 : i32 to vector<8x128xi32>
    %2 = arith.andi %0, %1 : vector<8x128xi32>
    %c0_i32 = arith.constant 0 : i32
    %3 = vector.broadcast %c0_i32 : i32 to vector<8x128xi32>
    %4 = arith.cmpi eq, %2, %3 : vector<8x128xi32>
    %c1_i32_0 = arith.constant 1 : i32
    %5 = vector.broadcast %c1_i32_0 : i32 to vector<8x128xi32>
    %6 = arith.xori %0, %5 : vector<8x128xi32>
    %7 = arith.sitofp %6 : vector<8x128xi32> to vector<8x128xf32>
    %8 = arith.sitofp %0 : vector<8x128xi32> to vector<8x128xf32>
    %c1_i32_1 = arith.constant 1 : i32
    %9 = tpu.dynamic_rotate %8 by %c1_i32_1 dim 1 : vector<8x128xf32>, i32 -> vector<8x128xf32>
    %10 = arith.cmpf oeq, %9, %7 : vector<8x128xf32>
    %c0 = arith.constant 0 : index
    %c0_2 = arith.constant 0 : index
    %11 = memref.load %arg2[%c0, %c0_2] : memref<8x2xf32, #tpu.memory_space<smem>>
    %c4 = arith.constant 4 : index
    %c1 = arith.constant 1 : index
    %12 = memref.load %arg2[%c4, %c1] : memref<8x2xf32, #tpu.memory_space<smem>>
    %13 = vector.broadcast %11 : f32 to vector<8x128xf32>
    %14 = vector.broadcast %12 : f32 to vector<8x128xf32>
    %15 = arith.select %4, %13, %14 : vector<8x128xi1>, vector<8x128xf32>
    %c1_3 = arith.constant 1 : index
    %c0_4 = arith.constant 0 : index
    %16 = memref.load %arg2[%c1_3, %c0_4] : memref<8x2xf32, #tpu.memory_space<smem>>
    %c5 = arith.constant 5 : index
    %c1_5 = arith.constant 1 : index
    %17 = memref.load %arg2[%c5, %c1_5] : memref<8x2xf32, #tpu.memory_space<smem>>
    %18 = vector.broadcast %16 : f32 to vector<8x128xf32>
    %19 = vector.broadcast %17 : f32 to vector<8x128xf32>
    %20 = arith.select %4, %18, %19 : vector<8x128xi1>, vector<8x128xf32>
    %c2 = arith.constant 2 : index
    %c0_6 = arith.constant 0 : index
    %21 = memref.load %arg2[%c2, %c0_6] : memref<8x2xf32, #tpu.memory_space<smem>>
    %c6 = arith.constant 6 : index
    %c1_7 = arith.constant 1 : index
    %22 = memref.load %arg2[%c6, %c1_7] : memref<8x2xf32, #tpu.memory_space<smem>>
    %23 = vector.broadcast %21 : f32 to vector<8x128xf32>
    %24 = vector.broadcast %22 : f32 to vector<8x128xf32>
    %25 = arith.select %4, %23, %24 : vector<8x128xi1>, vector<8x128xf32>
    %c3 = arith.constant 3 : index
    %c0_8 = arith.constant 0 : index
    %26 = memref.load %arg2[%c3, %c0_8] : memref<8x2xf32, #tpu.memory_space<smem>>
    %c7 = arith.constant 7 : index
    %c1_9 = arith.constant 1 : index
    %27 = memref.load %arg2[%c7, %c1_9] : memref<8x2xf32, #tpu.memory_space<smem>>
    %28 = vector.broadcast %26 : f32 to vector<8x128xf32>
    %29 = vector.broadcast %27 : f32 to vector<8x128xf32>
    %30 = arith.select %4, %28, %29 : vector<8x128xi1>, vector<8x128xf32>
    %c0_10 = arith.constant 0 : index
    %c1_11 = arith.constant 1 : index
    %31 = memref.load %arg2[%c0_10, %c1_11] : memref<8x2xf32, #tpu.memory_space<smem>>
    %c4_12 = arith.constant 4 : index
    %c0_13 = arith.constant 0 : index
    %32 = memref.load %arg2[%c4_12, %c0_13] : memref<8x2xf32, #tpu.memory_space<smem>>
    %33 = vector.broadcast %31 : f32 to vector<8x128xf32>
    %34 = vector.broadcast %32 : f32 to vector<8x128xf32>
    %35 = arith.select %4, %33, %34 : vector<8x128xi1>, vector<8x128xf32>
    %c1_14 = arith.constant 1 : index
    %c1_15 = arith.constant 1 : index
    %36 = memref.load %arg2[%c1_14, %c1_15] : memref<8x2xf32, #tpu.memory_space<smem>>
    %c5_16 = arith.constant 5 : index
    %c0_17 = arith.constant 0 : index
    %37 = memref.load %arg2[%c5_16, %c0_17] : memref<8x2xf32, #tpu.memory_space<smem>>
    %38 = vector.broadcast %36 : f32 to vector<8x128xf32>
    %39 = vector.broadcast %37 : f32 to vector<8x128xf32>
    %40 = arith.select %4, %38, %39 : vector<8x128xi1>, vector<8x128xf32>
    %c2_18 = arith.constant 2 : index
    %c1_19 = arith.constant 1 : index
    %41 = memref.load %arg2[%c2_18, %c1_19] : memref<8x2xf32, #tpu.memory_space<smem>>
    %c6_20 = arith.constant 6 : index
    %c0_21 = arith.constant 0 : index
    %42 = memref.load %arg2[%c6_20, %c0_21] : memref<8x2xf32, #tpu.memory_space<smem>>
    %43 = vector.broadcast %41 : f32 to vector<8x128xf32>
    %44 = vector.broadcast %42 : f32 to vector<8x128xf32>
    %45 = arith.select %4, %43, %44 : vector<8x128xi1>, vector<8x128xf32>
    %c3_22 = arith.constant 3 : index
    %c1_23 = arith.constant 1 : index
    %46 = memref.load %arg2[%c3_22, %c1_23] : memref<8x2xf32, #tpu.memory_space<smem>>
    %c7_24 = arith.constant 7 : index
    %c0_25 = arith.constant 0 : index
    %47 = memref.load %arg2[%c7_24, %c0_25] : memref<8x2xf32, #tpu.memory_space<smem>>
    %48 = vector.broadcast %46 : f32 to vector<8x128xf32>
    %49 = vector.broadcast %47 : f32 to vector<8x128xf32>
    %50 = arith.select %4, %48, %49 : vector<8x128xi1>, vector<8x128xf32>
    %c0_26 = arith.constant 0 : index
    %51 = memref.load %arg3[%c0_26] : memref<8xf32, #tpu.memory_space<smem>>
    %c4_27 = arith.constant 4 : index
    %52 = memref.load %arg3[%c4_27] : memref<8xf32, #tpu.memory_space<smem>>
    %53 = vector.broadcast %51 : f32 to vector<8x128xf32>
    %54 = vector.broadcast %52 : f32 to vector<8x128xf32>
    %55 = arith.select %4, %53, %54 : vector<8x128xi1>, vector<8x128xf32>
    %c1_28 = arith.constant 1 : index
    %56 = memref.load %arg3[%c1_28] : memref<8xf32, #tpu.memory_space<smem>>
    %c5_29 = arith.constant 5 : index
    %57 = memref.load %arg3[%c5_29] : memref<8xf32, #tpu.memory_space<smem>>
    %58 = vector.broadcast %56 : f32 to vector<8x128xf32>
    %59 = vector.broadcast %57 : f32 to vector<8x128xf32>
    %60 = arith.select %4, %58, %59 : vector<8x128xi1>, vector<8x128xf32>
    %c2_30 = arith.constant 2 : index
    %61 = memref.load %arg3[%c2_30] : memref<8xf32, #tpu.memory_space<smem>>
    %c6_31 = arith.constant 6 : index
    %62 = memref.load %arg3[%c6_31] : memref<8xf32, #tpu.memory_space<smem>>
    %63 = vector.broadcast %61 : f32 to vector<8x128xf32>
    %64 = vector.broadcast %62 : f32 to vector<8x128xf32>
    %65 = arith.select %4, %63, %64 : vector<8x128xi1>, vector<8x128xf32>
    %c3_32 = arith.constant 3 : index
    %66 = memref.load %arg3[%c3_32] : memref<8xf32, #tpu.memory_space<smem>>
    %c7_33 = arith.constant 7 : index
    %67 = memref.load %arg3[%c7_33] : memref<8xf32, #tpu.memory_space<smem>>
    %68 = vector.broadcast %66 : f32 to vector<8x128xf32>
    %69 = vector.broadcast %67 : f32 to vector<8x128xf32>
    %70 = arith.select %4, %68, %69 : vector<8x128xi1>, vector<8x128xf32>
    %c0_34 = arith.constant 0 : index
    %c0_35 = arith.constant 0 : index
    %71 = memref.load %arg4[%c0_34, %c0_35] : memref<2x8xf32, #tpu.memory_space<smem>>
    %c1_36 = arith.constant 1 : index
    %c4_37 = arith.constant 4 : index
    %72 = memref.load %arg4[%c1_36, %c4_37] : memref<2x8xf32, #tpu.memory_space<smem>>
    %73 = vector.broadcast %71 : f32 to vector<8x128xf32>
    %74 = vector.broadcast %72 : f32 to vector<8x128xf32>
    %75 = arith.select %4, %73, %74 : vector<8x128xi1>, vector<8x128xf32>
    %c0_38 = arith.constant 0 : index
    %c1_39 = arith.constant 1 : index
    %76 = memref.load %arg4[%c0_38, %c1_39] : memref<2x8xf32, #tpu.memory_space<smem>>
    %c1_40 = arith.constant 1 : index
    %c5_41 = arith.constant 5 : index
    %77 = memref.load %arg4[%c1_40, %c5_41] : memref<2x8xf32, #tpu.memory_space<smem>>
    %78 = vector.broadcast %76 : f32 to vector<8x128xf32>
    %79 = vector.broadcast %77 : f32 to vector<8x128xf32>
    %80 = arith.select %4, %78, %79 : vector<8x128xi1>, vector<8x128xf32>
    %c0_42 = arith.constant 0 : index
    %c2_43 = arith.constant 2 : index
    %81 = memref.load %arg4[%c0_42, %c2_43] : memref<2x8xf32, #tpu.memory_space<smem>>
    %c1_44 = arith.constant 1 : index
    %c6_45 = arith.constant 6 : index
    %82 = memref.load %arg4[%c1_44, %c6_45] : memref<2x8xf32, #tpu.memory_space<smem>>
    %83 = vector.broadcast %81 : f32 to vector<8x128xf32>
    %84 = vector.broadcast %82 : f32 to vector<8x128xf32>
    %85 = arith.select %4, %83, %84 : vector<8x128xi1>, vector<8x128xf32>
    %c0_46 = arith.constant 0 : index
    %c3_47 = arith.constant 3 : index
    %86 = memref.load %arg4[%c0_46, %c3_47] : memref<2x8xf32, #tpu.memory_space<smem>>
    %c1_48 = arith.constant 1 : index
    %c7_49 = arith.constant 7 : index
    %87 = memref.load %arg4[%c1_48, %c7_49] : memref<2x8xf32, #tpu.memory_space<smem>>
    %88 = vector.broadcast %86 : f32 to vector<8x128xf32>
    %89 = vector.broadcast %87 : f32 to vector<8x128xf32>
    %90 = arith.select %4, %88, %89 : vector<8x128xi1>, vector<8x128xf32>
    %c1_50 = arith.constant 1 : index
    %c0_51 = arith.constant 0 : index
    %91 = memref.load %arg4[%c1_50, %c0_51] : memref<2x8xf32, #tpu.memory_space<smem>>
    %c0_52 = arith.constant 0 : index
    %c4_53 = arith.constant 4 : index
    %92 = memref.load %arg4[%c0_52, %c4_53] : memref<2x8xf32, #tpu.memory_space<smem>>
    %93 = vector.broadcast %91 : f32 to vector<8x128xf32>
    %94 = vector.broadcast %92 : f32 to vector<8x128xf32>
    %95 = arith.select %4, %93, %94 : vector<8x128xi1>, vector<8x128xf32>
    %c1_54 = arith.constant 1 : index
    %c1_55 = arith.constant 1 : index
    %96 = memref.load %arg4[%c1_54, %c1_55] : memref<2x8xf32, #tpu.memory_space<smem>>
    %c0_56 = arith.constant 0 : index
    %c5_57 = arith.constant 5 : index
    %97 = memref.load %arg4[%c0_56, %c5_57] : memref<2x8xf32, #tpu.memory_space<smem>>
    %98 = vector.broadcast %96 : f32 to vector<8x128xf32>
    %99 = vector.broadcast %97 : f32 to vector<8x128xf32>
    %100 = arith.select %4, %98, %99 : vector<8x128xi1>, vector<8x128xf32>
    %c1_58 = arith.constant 1 : index
    %c2_59 = arith.constant 2 : index
    %101 = memref.load %arg4[%c1_58, %c2_59] : memref<2x8xf32, #tpu.memory_space<smem>>
    %c0_60 = arith.constant 0 : index
    %c6_61 = arith.constant 6 : index
    %102 = memref.load %arg4[%c0_60, %c6_61] : memref<2x8xf32, #tpu.memory_space<smem>>
    %103 = vector.broadcast %101 : f32 to vector<8x128xf32>
    %104 = vector.broadcast %102 : f32 to vector<8x128xf32>
    %105 = arith.select %4, %103, %104 : vector<8x128xi1>, vector<8x128xf32>
    %c1_62 = arith.constant 1 : index
    %c3_63 = arith.constant 3 : index
    %106 = memref.load %arg4[%c1_62, %c3_63] : memref<2x8xf32, #tpu.memory_space<smem>>
    %c0_64 = arith.constant 0 : index
    %c7_65 = arith.constant 7 : index
    %107 = memref.load %arg4[%c0_64, %c7_65] : memref<2x8xf32, #tpu.memory_space<smem>>
    %108 = vector.broadcast %106 : f32 to vector<8x128xf32>
    %109 = vector.broadcast %107 : f32 to vector<8x128xf32>
    %110 = arith.select %4, %108, %109 : vector<8x128xi1>, vector<8x128xf32>
    %c0_66 = arith.constant 0 : index
    %111 = memref.load %arg5[%c0_66] : memref<2xf32, #tpu.memory_space<smem>>
    %c1_67 = arith.constant 1 : index
    %112 = memref.load %arg5[%c1_67] : memref<2xf32, #tpu.memory_space<smem>>
    %113 = vector.broadcast %111 : f32 to vector<8x128xf32>
    %114 = vector.broadcast %112 : f32 to vector<8x128xf32>
    %115 = arith.select %4, %113, %114 : vector<8x128xi1>, vector<8x128xf32>
    %c0_i32_68 = arith.constant 0 : i32
    %c32_i32 = arith.constant 32 : i32
    %116 = arith.muli %c0_i32_68, %c32_i32 : i32
    %117 = tpu.assume_multiple %116, 32 : i32
    %c0_i32_69 = arith.constant 0 : i32
    %118 = arith.addi %117, %c0_i32_69 : i32
    %119 = arith.index_cast %118 : i32 to index
    %c0_70 = arith.constant 0 : index
    %120 = vector.load %arg1[%119, %c0_70] : memref<32x128xf32, #tpu.memory_space<vmem>>, vector<8x128xf32>
    %c1_i32_71 = arith.constant 1 : i32
    %121 = tpu.dynamic_rotate %120 by %c1_i32_71 dim 1 : vector<8x128xf32>, i32 -> vector<8x128xf32>
    %c127_i32 = arith.constant 127 : i32
    %122 = tpu.dynamic_rotate %120 by %c127_i32 dim 1 : vector<8x128xf32>, i32 -> vector<8x128xf32>
    %123 = arith.select %10, %121, %122 : vector<8x128xi1>, vector<8x128xf32>
    %124 = arith.mulf %15, %120 : vector<8x128xf32>
    %125 = arith.mulf %35, %123 : vector<8x128xf32>
    %126 = arith.addf %124, %125 : vector<8x128xf32>
    %127 = arith.addf %126, %55 : vector<8x128xf32>
    %cst = arith.constant 0.00999999977 : f32
    %128 = vector.broadcast %cst : f32 to vector<8x128xf32>
    %129 = arith.mulf %128, %127 : vector<8x128xf32>
    %130 = arith.maximumf %127, %129 : vector<8x128xf32>
    %131 = arith.mulf %75, %130 : vector<8x128xf32>
    %132 = arith.addf %115, %131 : vector<8x128xf32>
    %133 = arith.mulf %95, %130 : vector<8x128xf32>
    %134 = arith.mulf %20, %120 : vector<8x128xf32>
    %135 = arith.mulf %40, %123 : vector<8x128xf32>
    %136 = arith.addf %134, %135 : vector<8x128xf32>
    %137 = arith.addf %136, %60 : vector<8x128xf32>
    %cst_72 = arith.constant 0.00999999977 : f32
    %138 = vector.broadcast %cst_72 : f32 to vector<8x128xf32>
    %139 = arith.mulf %138, %137 : vector<8x128xf32>
    %140 = arith.maximumf %137, %139 : vector<8x128xf32>
    %141 = arith.mulf %80, %140 : vector<8x128xf32>
    %142 = arith.addf %132, %141 : vector<8x128xf32>
    %143 = arith.mulf %100, %140 : vector<8x128xf32>
    %144 = arith.addf %133, %143 : vector<8x128xf32>
    %145 = arith.mulf %25, %120 : vector<8x128xf32>
    %146 = arith.mulf %45, %123 : vector<8x128xf32>
    %147 = arith.addf %145, %146 : vector<8x128xf32>
    %148 = arith.addf %147, %65 : vector<8x128xf32>
    %cst_73 = arith.constant 0.00999999977 : f32
    %149 = vector.broadcast %cst_73 : f32 to vector<8x128xf32>
    %150 = arith.mulf %149, %148 : vector<8x128xf32>
    %151 = arith.maximumf %148, %150 : vector<8x128xf32>
    %152 = arith.mulf %85, %151 : vector<8x128xf32>
    %153 = arith.addf %142, %152 : vector<8x128xf32>
    %154 = arith.mulf %105, %151 : vector<8x128xf32>
    %155 = arith.addf %144, %154 : vector<8x128xf32>
    %156 = arith.mulf %30, %120 : vector<8x128xf32>
    %157 = arith.mulf %50, %123 : vector<8x128xf32>
    %158 = arith.addf %156, %157 : vector<8x128xf32>
    %159 = arith.addf %158, %70 : vector<8x128xf32>
    %cst_74 = arith.constant 0.00999999977 : f32
    %160 = vector.broadcast %cst_74 : f32 to vector<8x128xf32>
    %161 = arith.mulf %160, %159 : vector<8x128xf32>
    %162 = arith.maximumf %159, %161 : vector<8x128xf32>
    %163 = arith.mulf %90, %162 : vector<8x128xf32>
    %164 = arith.addf %153, %163 : vector<8x128xf32>
    %165 = arith.mulf %110, %162 : vector<8x128xf32>
    %166 = arith.addf %155, %165 : vector<8x128xf32>
    %c1_i32_75 = arith.constant 1 : i32
    %167 = tpu.dynamic_rotate %166 by %c1_i32_75 dim 1 : vector<8x128xf32>, i32 -> vector<8x128xf32>
    %c127_i32_76 = arith.constant 127 : i32
    %168 = tpu.dynamic_rotate %166 by %c127_i32_76 dim 1 : vector<8x128xf32>, i32 -> vector<8x128xf32>
    %169 = arith.select %10, %167, %168 : vector<8x128xi1>, vector<8x128xf32>
    %170 = arith.addf %164, %169 : vector<8x128xf32>
    %cst_77 = arith.constant 0.00999999977 : f32
    %171 = vector.broadcast %cst_77 : f32 to vector<8x128xf32>
    %172 = arith.mulf %171, %170 : vector<8x128xf32>
    %173 = arith.maximumf %170, %172 : vector<8x128xf32>
    %174 = arith.index_cast %118 : i32 to index
    %c0_78 = arith.constant 0 : index
    %175 = vector.load %arg6[%174, %c0_78] : memref<32x128xf32, #tpu.memory_space<vmem>>, vector<8x128xf32>
    tpu.vector_store %arg6[%174, %c0_78], %173 {strides = array<i32>} : memref<32x128xf32, #tpu.memory_space<vmem>>, vector<8x128xf32>,
    %c8_i32 = arith.constant 8 : i32
    %176 = arith.addi %117, %c8_i32 : i32
    %177 = arith.index_cast %176 : i32 to index
    %c0_79 = arith.constant 0 : index
    %178 = vector.load %arg1[%177, %c0_79] : memref<32x128xf32, #tpu.memory_space<vmem>>, vector<8x128xf32>
    %c1_i32_80 = arith.constant 1 : i32
    %179 = tpu.dynamic_rotate %178 by %c1_i32_80 dim 1 : vector<8x128xf32>, i32 -> vector<8x128xf32>
    %c127_i32_81 = arith.constant 127 : i32
    %180 = tpu.dynamic_rotate %178 by %c127_i32_81 dim 1 : vector<8x128xf32>, i32 -> vector<8x128xf32>
    %181 = arith.select %10, %179, %180 : vector<8x128xi1>, vector<8x128xf32>
    %182 = arith.mulf %15, %178 : vector<8x128xf32>
    %183 = arith.mulf %35, %181 : vector<8x128xf32>
    %184 = arith.addf %182, %183 : vector<8x128xf32>
    %185 = arith.addf %184, %55 : vector<8x128xf32>
    %cst_82 = arith.constant 0.00999999977 : f32
    %186 = vector.broadcast %cst_82 : f32 to vector<8x128xf32>
    %187 = arith.mulf %186, %185 : vector<8x128xf32>
    %188 = arith.maximumf %185, %187 : vector<8x128xf32>
    %189 = arith.mulf %75, %188 : vector<8x128xf32>
    %190 = arith.addf %115, %189 : vector<8x128xf32>
    %191 = arith.mulf %95, %188 : vector<8x128xf32>
    %192 = arith.mulf %20, %178 : vector<8x128xf32>
    %193 = arith.mulf %40, %181 : vector<8x128xf32>
    %194 = arith.addf %192, %193 : vector<8x128xf32>
    %195 = arith.addf %194, %60 : vector<8x128xf32>
    %cst_83 = arith.constant 0.00999999977 : f32
    %196 = vector.broadcast %cst_83 : f32 to vector<8x128xf32>
    %197 = arith.mulf %196, %195 : vector<8x128xf32>
    %198 = arith.maximumf %195, %197 : vector<8x128xf32>
    %199 = arith.mulf %80, %198 : vector<8x128xf32>
    %200 = arith.addf %190, %199 : vector<8x128xf32>
    %201 = arith.mulf %100, %198 : vector<8x128xf32>
    %202 = arith.addf %191, %201 : vector<8x128xf32>
    %203 = arith.mulf %25, %178 : vector<8x128xf32>
    %204 = arith.mulf %45, %181 : vector<8x128xf32>
    %205 = arith.addf %203, %204 : vector<8x128xf32>
    %206 = arith.addf %205, %65 : vector<8x128xf32>
    %cst_84 = arith.constant 0.00999999977 : f32
    %207 = vector.broadcast %cst_84 : f32 to vector<8x128xf32>
    %208 = arith.mulf %207, %206 : vector<8x128xf32>
    %209 = arith.maximumf %206, %208 : vector<8x128xf32>
    %210 = arith.mulf %85, %209 : vector<8x128xf32>
    %211 = arith.addf %200, %210 : vector<8x128xf32>
    %212 = arith.mulf %105, %209 : vector<8x128xf32>
    %213 = arith.addf %202, %212 : vector<8x128xf32>
    %214 = arith.mulf %30, %178 : vector<8x128xf32>
    %215 = arith.mulf %50, %181 : vector<8x128xf32>
    %216 = arith.addf %214, %215 : vector<8x128xf32>
    %217 = arith.addf %216, %70 : vector<8x128xf32>
    %cst_85 = arith.constant 0.00999999977 : f32
    %218 = vector.broadcast %cst_85 : f32 to vector<8x128xf32>
    %219 = arith.mulf %218, %217 : vector<8x128xf32>
    %220 = arith.maximumf %217, %219 : vector<8x128xf32>
    %221 = arith.mulf %90, %220 : vector<8x128xf32>
    %222 = arith.addf %211, %221 : vector<8x128xf32>
    %223 = arith.mulf %110, %220 : vector<8x128xf32>
    %224 = arith.addf %213, %223 : vector<8x128xf32>
    %c1_i32_86 = arith.constant 1 : i32
    %225 = tpu.dynamic_rotate %224 by %c1_i32_86 dim 1 : vector<8x128xf32>, i32 -> vector<8x128xf32>
    %c127_i32_87 = arith.constant 127 : i32
    %226 = tpu.dynamic_rotate %224 by %c127_i32_87 dim 1 : vector<8x128xf32>, i32 -> vector<8x128xf32>
    %227 = arith.select %10, %225, %226 : vector<8x128xi1>, vector<8x128xf32>
    %228 = arith.addf %222, %227 : vector<8x128xf32>
    %cst_88 = arith.constant 0.00999999977 : f32
    %229 = vector.broadcast %cst_88 : f32 to vector<8x128xf32>
    %230 = arith.mulf %229, %228 : vector<8x128xf32>
    %231 = arith.maximumf %228, %230 : vector<8x128xf32>
    %232 = arith.index_cast %176 : i32 to index
    %c0_89 = arith.constant 0 : index
    %233 = vector.load %arg6[%232, %c0_89] : memref<32x128xf32, #tpu.memory_space<vmem>>, vector<8x128xf32>
    tpu.vector_store %arg6[%232, %c0_89], %231 {strides = array<i32>} : memref<32x128xf32, #tpu.memory_space<vmem>>, vector<8x128xf32>,
    %c16_i32 = arith.constant 16 : i32
    %234 = arith.addi %117, %c16_i32 : i32
    %235 = arith.index_cast %234 : i32 to index
    %c0_90 = arith.constant 0 : index
    %236 = vector.load %arg1[%235, %c0_90] : memref<32x128xf32, #tpu.memory_space<vmem>>, vector<8x128xf32>
    %c1_i32_91 = arith.constant 1 : i32
    %237 = tpu.dynamic_rotate %236 by %c1_i32_91 dim 1 : vector<8x128xf32>, i32 -> vector<8x128xf32>
    %c127_i32_92 = arith.constant 127 : i32
    %238 = tpu.dynamic_rotate %236 by %c127_i32_92 dim 1 : vector<8x128xf32>, i32 -> vector<8x128xf32>
    %239 = arith.select %10, %237, %238 : vector<8x128xi1>, vector<8x128xf32>
    %240 = arith.mulf %15, %236 : vector<8x128xf32>
    %241 = arith.mulf %35, %239 : vector<8x128xf32>
    %242 = arith.addf %240, %241 : vector<8x128xf32>
    %243 = arith.addf %242, %55 : vector<8x128xf32>
    %cst_93 = arith.constant 0.00999999977 : f32
    %244 = vector.broadcast %cst_93 : f32 to vector<8x128xf32>
    %245 = arith.mulf %244, %243 : vector<8x128xf32>
    %246 = arith.maximumf %243, %245 : vector<8x128xf32>
    %247 = arith.mulf %75, %246 : vector<8x128xf32>
    %248 = arith.addf %115, %247 : vector<8x128xf32>
    %249 = arith.mulf %95, %246 : vector<8x128xf32>
    %250 = arith.mulf %20, %236 : vector<8x128xf32>
    %251 = arith.mulf %40, %239 : vector<8x128xf32>
    %252 = arith.addf %250, %251 : vector<8x128xf32>
    %253 = arith.addf %252, %60 : vector<8x128xf32>
    %cst_94 = arith.constant 0.00999999977 : f32
    %254 = vector.broadcast %cst_94 : f32 to vector<8x128xf32>
    %255 = arith.mulf %254, %253 : vector<8x128xf32>
    %256 = arith.maximumf %253, %255 : vector<8x128xf32>
    %257 = arith.mulf %80, %256 : vector<8x128xf32>
    %258 = arith.addf %248, %257 : vector<8x128xf32>
    %259 = arith.mulf %100, %256 : vector<8x128xf32>
    %260 = arith.addf %249, %259 : vector<8x128xf32>
    %261 = arith.mulf %25, %236 : vector<8x128xf32>
    %262 = arith.mulf %45, %239 : vector<8x128xf32>
    %263 = arith.addf %261, %262 : vector<8x128xf32>
    %264 = arith.addf %263, %65 : vector<8x128xf32>
    %cst_95 = arith.constant 0.00999999977 : f32
    %265 = vector.broadcast %cst_95 : f32 to vector<8x128xf32>
    %266 = arith.mulf %265, %264 : vector<8x128xf32>
    %267 = arith.maximumf %264, %266 : vector<8x128xf32>
    %268 = arith.mulf %85, %267 : vector<8x128xf32>
    %269 = arith.addf %258, %268 : vector<8x128xf32>
    %270 = arith.mulf %105, %267 : vector<8x128xf32>
    %271 = arith.addf %260, %270 : vector<8x128xf32>
    %272 = arith.mulf %30, %236 : vector<8x128xf32>
    %273 = arith.mulf %50, %239 : vector<8x128xf32>
    %274 = arith.addf %272, %273 : vector<8x128xf32>
    %275 = arith.addf %274, %70 : vector<8x128xf32>
    %cst_96 = arith.constant 0.00999999977 : f32
    %276 = vector.broadcast %cst_96 : f32 to vector<8x128xf32>
    %277 = arith.mulf %276, %275 : vector<8x128xf32>
    %278 = arith.maximumf %275, %277 : vector<8x128xf32>
    %279 = arith.mulf %90, %278 : vector<8x128xf32>
    %280 = arith.addf %269, %279 : vector<8x128xf32>
    %281 = arith.mulf %110, %278 : vector<8x128xf32>
    %282 = arith.addf %271, %281 : vector<8x128xf32>
    %c1_i32_97 = arith.constant 1 : i32
    %283 = tpu.dynamic_rotate %282 by %c1_i32_97 dim 1 : vector<8x128xf32>, i32 -> vector<8x128xf32>
    %c127_i32_98 = arith.constant 127 : i32
    %284 = tpu.dynamic_rotate %282 by %c127_i32_98 dim 1 : vector<8x128xf32>, i32 -> vector<8x128xf32>
    %285 = arith.select %10, %283, %284 : vector<8x128xi1>, vector<8x128xf32>
    %286 = arith.addf %280, %285 : vector<8x128xf32>
    %cst_99 = arith.constant 0.00999999977 : f32
    %287 = vector.broadcast %cst_99 : f32 to vector<8x128xf32>
    %288 = arith.mulf %287, %286 : vector<8x128xf32>
    %289 = arith.maximumf %286, %288 : vector<8x128xf32>
    %290 = arith.index_cast %234 : i32 to index
    %c0_100 = arith.constant 0 : index
    %291 = vector.load %arg6[%290, %c0_100] : memref<32x128xf32, #tpu.memory_space<vmem>>, vector<8x128xf32>
    tpu.vector_store %arg6[%290, %c0_100], %289 {strides = array<i32>} : memref<32x128xf32, #tpu.memory_space<vmem>>, vector<8x128xf32>,
    %c24_i32 = arith.constant 24 : i32
    %292 = arith.addi %117, %c24_i32 : i32
    %293 = arith.index_cast %292 : i32 to index
    %c0_101 = arith.constant 0 : index
    %294 = vector.load %arg1[%293, %c0_101] : memref<32x128xf32, #tpu.memory_space<vmem>>, vector<8x128xf32>
    %c1_i32_102 = arith.constant 1 : i32
    %295 = tpu.dynamic_rotate %294 by %c1_i32_102 dim 1 : vector<8x128xf32>, i32 -> vector<8x128xf32>
    %c127_i32_103 = arith.constant 127 : i32
    %296 = tpu.dynamic_rotate %294 by %c127_i32_103 dim 1 : vector<8x128xf32>, i32 -> vector<8x128xf32>
    %297 = arith.select %10, %295, %296 : vector<8x128xi1>, vector<8x128xf32>
    %298 = arith.mulf %15, %294 : vector<8x128xf32>
    %299 = arith.mulf %35, %297 : vector<8x128xf32>
    %300 = arith.addf %298, %299 : vector<8x128xf32>
    %301 = arith.addf %300, %55 : vector<8x128xf32>
    %cst_104 = arith.constant 0.00999999977 : f32
    %302 = vector.broadcast %cst_104 : f32 to vector<8x128xf32>
    %303 = arith.mulf %302, %301 : vector<8x128xf32>
    %304 = arith.maximumf %301, %303 : vector<8x128xf32>
    %305 = arith.mulf %75, %304 : vector<8x128xf32>
    %306 = arith.addf %115, %305 : vector<8x128xf32>
    %307 = arith.mulf %95, %304 : vector<8x128xf32>
    %308 = arith.mulf %20, %294 : vector<8x128xf32>
    %309 = arith.mulf %40, %297 : vector<8x128xf32>
    %310 = arith.addf %308, %309 : vector<8x128xf32>
    %311 = arith.addf %310, %60 : vector<8x128xf32>
    %cst_105 = arith.constant 0.00999999977 : f32
    %312 = vector.broadcast %cst_105 : f32 to vector<8x128xf32>
    %313 = arith.mulf %312, %311 : vector<8x128xf32>
    %314 = arith.maximumf %311, %313 : vector<8x128xf32>
    %315 = arith.mulf %80, %314 : vector<8x128xf32>
    %316 = arith.addf %306, %315 : vector<8x128xf32>
    %317 = arith.mulf %100, %314 : vector<8x128xf32>
    %318 = arith.addf %307, %317 : vector<8x128xf32>
    %319 = arith.mulf %25, %294 : vector<8x128xf32>
    %320 = arith.mulf %45, %297 : vector<8x128xf32>
    %321 = arith.addf %319, %320 : vector<8x128xf32>
    %322 = arith.addf %321, %65 : vector<8x128xf32>
    %cst_106 = arith.constant 0.00999999977 : f32
    %323 = vector.broadcast %cst_106 : f32 to vector<8x128xf32>
    %324 = arith.mulf %323, %322 : vector<8x128xf32>
    %325 = arith.maximumf %322, %324 : vector<8x128xf32>
    %326 = arith.mulf %85, %325 : vector<8x128xf32>
    %327 = arith.addf %316, %326 : vector<8x128xf32>
    %328 = arith.mulf %105, %325 : vector<8x128xf32>
    %329 = arith.addf %318, %328 : vector<8x128xf32>
    %330 = arith.mulf %30, %294 : vector<8x128xf32>
    %331 = arith.mulf %50, %297 : vector<8x128xf32>
    %332 = arith.addf %330, %331 : vector<8x128xf32>
    %333 = arith.addf %332, %70 : vector<8x128xf32>
    %cst_107 = arith.constant 0.00999999977 : f32
    %334 = vector.broadcast %cst_107 : f32 to vector<8x128xf32>
    %335 = arith.mulf %334, %333 : vector<8x128xf32>
    %336 = arith.maximumf %333, %335 : vector<8x128xf32>
    %337 = arith.mulf %90, %336 : vector<8x128xf32>
    %338 = arith.addf %327, %337 : vector<8x128xf32>
    %339 = arith.mulf %110, %336 : vector<8x128xf32>
    %340 = arith.addf %329, %339 : vector<8x128xf32>
    %c1_i32_108 = arith.constant 1 : i32
    %341 = tpu.dynamic_rotate %340 by %c1_i32_108 dim 1 : vector<8x128xf32>, i32 -> vector<8x128xf32>
    %c127_i32_109 = arith.constant 127 : i32
    %342 = tpu.dynamic_rotate %340 by %c127_i32_109 dim 1 : vector<8x128xf32>, i32 -> vector<8x128xf32>
    %343 = arith.select %10, %341, %342 : vector<8x128xi1>, vector<8x128xf32>
    %344 = arith.addf %338, %343 : vector<8x128xf32>
    %cst_110 = arith.constant 0.00999999977 : f32
    %345 = vector.broadcast %cst_110 : f32 to vector<8x128xf32>
    %346 = arith.mulf %345, %344 : vector<8x128xf32>
    %347 = arith.maximumf %344, %346 : vector<8x128xf32>
    %348 = arith.index_cast %292 : i32 to index
    %c0_111 = arith.constant 0 : index
    %349 = vector.load %arg6[%348, %c0_111] : memref<32x128xf32, #tpu.memory_space<vmem>>, vector<8x128xf32>
    tpu.vector_store %arg6[%348, %c0_111], %347 {strides = array<i32>} : memref<32x128xf32, #tpu.memory_space<vmem>>, vector<8x128xf32>,
    %c1_i32_112 = arith.constant 1 : i32
    return
  }
  func.func @transform_0(%arg0: i32) -> (i32, i32) {
    %c0_i32 = arith.constant 0 : i32
    %c0_i32_0 = arith.constant 0 : i32
    return %arg0, %c0_i32 : i32, i32
  }
  func.func @transform_1(%arg0: i32) -> (i32, i32) {
    %c0_i32 = arith.constant 0 : i32
    %c0_i32_0 = arith.constant 0 : i32
    %c0_i32_1 = arith.constant 0 : i32
    return %c0_i32, %c0_i32_0 : i32, i32
  }
  func.func @transform_2(%arg0: i32) -> i32 {
    %c0_i32 = arith.constant 0 : i32
    %c0_i32_0 = arith.constant 0 : i32
    return %c0_i32 : i32
  }
  func.func @transform_3(%arg0: i32) -> (i32, i32) {
    %c0_i32 = arith.constant 0 : i32
    %c0_i32_0 = arith.constant 0 : i32
    %c0_i32_1 = arith.constant 0 : i32
    return %c0_i32, %c0_i32_0 : i32, i32
  }
  func.func @transform_4(%arg0: i32) -> i32 {
    %c0_i32 = arith.constant 0 : i32
    %c0_i32_0 = arith.constant 0 : i32
    return %c0_i32 : i32
  }
  func.func @transform_5(%arg0: i32) -> (i32, i32) {
    %c0_i32 = arith.constant 0 : i32
    %c0_i32_0 = arith.constant 0 : i32
    return %arg0, %c0_i32 : i32, i32
  }
}

</mosaic_0001>

<llo_original>
// kernel: block_forward.1
$region0: #{block_forward.1}
  #allocation0 [shape = 'u32[]', space=smem, size = 0x4, offset = 0x4, fixed_abs, tag = 'smem constant byte address 0x4 - core index']
  #allocation1 [shape = 'u32[144,128]{1,0:T(1,128)}', space=vmem, size = 0x12000, scoped, tag = 'internal scratch']
  %s0 = inlined_call_operand.vmem [shape: f32[64,128], index: 0, kind: input, shape index: {}]
  %s1 = inlined_call_operand.vmem [shape: f32[8,2], index: 1, kind: input, shape index: {}]
  %s2 = inlined_call_operand.vmem [shape: f32[8], index: 2, kind: input, shape index: {}]
  %s3 = inlined_call_operand.vmem [shape: f32[2,8], index: 3, kind: input, shape index: {}]
  %s4 = inlined_call_operand.vmem [shape: f32[2], index: 4, kind: input, shape index: {}]
  %s5 = inlined_call_operand.vmem [shape: f32[64,128], index: 5, kind: output, shape index: {}]
  %s6 = sld [smem:[#allocation0]]
  $region69: #{block_forward.1} parent=0
    _
  %s8 = ssub.s32 1, %s6
  %s9 = scalar_select 0, %s8, %s6
  $region1: #{block_forward.1} parent=0
    #allocation2 [shape = 'u8[4096]{0}', space=smem, size = 0x1000, scoped, tag = 'input window, operand 1, single buffered']
    #allocation3 [shape = 's32[2]{0}', space=sflag, size = 0x8, scoped, tag = 'scoped memory for block_forward.1']
    #allocation4 [shape = 'u8[512]{0}', space=smem, size = 0x200, scoped, tag = 'input window, operand 2, single buffered']
    #allocation5 [shape = 's32[1]{0}', space=sflag, size = 0x4, scoped, tag = 'scoped memory for block_forward.1']
    #allocation6 [shape = 'u8[1024]{0}', space=smem, size = 0x400, scoped, tag = 'input window, operand 3, single buffered']
    #allocation7 [shape = 'u8[512]{0}', space=smem, size = 0x200, scoped, tag = 'input window, operand 4, single buffered']
    #allocation8 [shape = 's32[1]{0}', space=sflag, size = 0x4, scoped, tag = 'scoped memory for block_forward.1']
    %10 = vsyncpa [#allocation3], 0
    %11 = vsyncpa [#allocation5], 0
    %12 = vsyncpa [#allocation8], 0
    loop: start=0, step=1, limit=4
    $region2: #{block_forward.1} parent=1 // loop_pre_header
      _
    $region3: #{block_forward.1} parent=1 // loop_header
      %s14 = sphi 0, %s18
      %p15 = scmp.ge.s32.totalorder %s14, 4
      %s24 = sphi 0, %s26
      %s27 = sphi 0, %s24
      %s28 = sphi 0, %s27
      %s44 = sphi 0, %s28
      %s48 = sphi 0, %s48
      %s50 = sphi 0, %s48
      %s51 = sphi 0, %s50
      %s65 = sphi 0, %s51
      %s69 = sphi 0, %s69
      %s71 = sphi 0, %s69
      %s72 = sphi 0, %s71
      %s86 = sphi 0, %s72
      %s90 = sphi 0, %s90
      %s92 = sphi 0, %s90
      %s93 = sphi 0, %s92
      %s107 = sphi 0, %s93
      %s111 = sphi 0, %s111
      %s113 = sphi 0, %s111
      %s114 = sphi 0, %s113
      %s128 = sphi 0, %s114
      %s134 = sphi 0, %s136
      %s137 = sphi 0, %s134
      %s138 = sphi 0, %s137
      %s154 = sphi 0, %s138
    $region4: #{block_forward.1} parent=1 // loop_header_branch
      %17 = sbr.rel (%p15) target = $region8
    $region5: #{block_forward.1} parent=1 // loop_body
      %s19 = ssub.s32 %s14, 1
      %s20 = ssub.s32 %s14, 2
      %s21 = sadd.s32 %s14, 1
      %s22 = ssub.s32 %s14, %s21
      %p23 = scmp.eq.s32.totalorder %s22, 0
      %s25 = sadd.s32 %s24, 1
      %s26 = scalar_select %p23, %s24, %s25
      %p29 = pneg %p23
      %p30 = scmp.eq.s32.totalorder %s14, 1
      %p31 = por %p29, %p30
      %p32 = scmp.ne.s32.totalorder %s24, %s27
      %p33 = scmp.eq.s32.totalorder %s14, 0
      %p34 = por %p32, %p33
      %p35 = scmp.ne.s32.totalorder %s24, %s27
      %p36 = scmp.eq.s32.totalorder %s19, 1
      %p37 = por %p35, %p36
      %p38 = scmp.ne.s32.totalorder %s27, %s28
      %p39 = scmp.eq.s32.totalorder %s19, 0
      %p40 = por %p38, %p39
      %p41 = scmp.ne.s32.totalorder %s27, %s28
      %p42 = scmp.eq.s32.totalorder %s20, 1
      %p43 = por %p41, %p42
      %p45 = scmp.ne.s32.totalorder %s28, %s44
      %p46 = scmp.eq.s32.totalorder %s20, 0
      %p47 = por %p45, %p46
      %s49 = sadd.s32 %s48, 1
      %p52 = scmp.eq.s32.totalorder %s14, 1
      %p53 = scmp.ne.s32.totalorder %s48, %s50
      %p54 = scmp.eq.s32.totalorder %s14, 0
      %p55 = por %p53, %p54
      %p56 = scmp.ne.s32.totalorder %s48, %s50
      %p57 = scmp.eq.s32.totalorder %s19, 1
      %p58 = por %p56, %p57
      %p59 = scmp.ne.s32.totalorder %s50, %s51
      %p60 = scmp.eq.s32.totalorder %s19, 0
      %p61 = por %p59, %p60
      %p62 = scmp.ne.s32.totalorder %s50, %s51
      %p63 = scmp.eq.s32.totalorder %s20, 1
      %p64 = por %p62, %p63
      %p66 = scmp.ne.s32.totalorder %s51, %s65
      %p67 = scmp.eq.s32.totalorder %s20, 0
      %p68 = por %p66, %p67
      %s70 = sadd.s32 %s69, 1
      %p73 = scmp.eq.s32.totalorder %s14, 1
      %p74 = scmp.ne.s32.totalorder %s69, %s71
      %p75 = scmp.eq.s32.totalorder %s14, 0
      %p76 = por %p74, %p75
      %p77 = scmp.ne.s32.totalorder %s69, %s71
      %p78 = scmp.eq.s32.totalorder %s19, 1
      %p79 = por %p77, %p78
      %p80 = scmp.ne.s32.totalorder %s71, %s72
      %p81 = scmp.eq.s32.totalorder %s19, 0
      %p82 = por %p80, %p81
      %p83 = scmp.ne.s32.totalorder %s71, %s72
      %p84 = scmp.eq.s32.totalorder %s20, 1
      %p85 = por %p83, %p84
      %p87 = scmp.ne.s32.totalorder %s72, %s86
      %p88 = scmp.eq.s32.totalorder %s20, 0
      %p89 = por %p87, %p88
      %s91 = sadd.s32 %s90, 1
      %p94 = scmp.eq.s32.totalorder %s14, 1
      %p95 = scmp.ne.s32.totalorder %s90, %s92
      %p96 = scmp.eq.s32.totalorder %s14, 0
      %p97 = por %p95, %p96
      %p98 = scmp.ne.s32.totalorder %s90, %s92
      %p99 = scmp.eq.s32.totalorder %s19, 1
      %p100 = por %p98, %p99
      %p101 = scmp.ne.s32.totalorder %s92, %s93
      %p102 = scmp.eq.s32.totalorder %s19, 0
      %p103 = por %p101, %p102
      %p104 = scmp.ne.s32.totalorder %s92, %s93
      %p105 = scmp.eq.s32.totalorder %s20, 1
      %p106 = por %p104, %p105
      %p108 = scmp.ne.s32.totalorder %s93, %s107
      %p109 = scmp.eq.s32.totalorder %s20, 0
      %p110 = por %p108, %p109
      %s112 = sadd.s32 %s111, 1
      %p115 = scmp.eq.s32.totalorder %s14, 1
      %p116 = scmp.ne.s32.totalorder %s111, %s113
      %p117 = scmp.eq.s32.totalorder %s14, 0
      %p118 = por %p116, %p117
      %p119 = scmp.ne.s32.totalorder %s111, %s113
      %p120 = scmp.eq.s32.totalorder %s19, 1
      %p121 = por %p119, %p120
      %p122 = scmp.ne.s32.totalorder %s113, %s114
      %p123 = scmp.eq.s32.totalorder %s19, 0
      %p124 = por %p122, %p123
      %p125 = scmp.ne.s32.totalorder %s113, %s114
      %p126 = scmp.eq.s32.totalorder %s20, 1
      %p127 = por %p125, %p126
      %p129 = scmp.ne.s32.totalorder %s114, %s128
      %p130 = scmp.eq.s32.totalorder %s20, 0
      %p131 = por %p129, %p130
      %s132 = ssub.s32 %s14, %s21
      %p133 = scmp.eq.s32.totalorder %s132, 0
      %s135 = sadd.s32 %s134, 1
      %s136 = scalar_select %p133, %s134, %s135
      %p139 = pneg %p133
      %p140 = scmp.eq.s32.totalorder %s14, 1
      %p141 = por %p139, %p140
      %p142 = scmp.ne.s32.totalorder %s134, %s137
      %p143 = scmp.eq.s32.totalorder %s14, 0
      %p144 = por %p142, %p143
      %p145 = scmp.ne.s32.totalorder %s134, %s137
      %p146 = scmp.eq.s32.totalorder %s19, 1
      %p147 = por %p145, %p146
      %p148 = scmp.ne.s32.totalorder %s137, %s138
      %p149 = scmp.eq.s32.totalorder %s19, 0
      %p150 = por %p148, %p149
      %p151 = scmp.ne.s32.totalorder %s137, %s138
      %p152 = scmp.eq.s32.totalorder %s20, 1
      %p153 = por %p151, %p152
      %p155 = scmp.ne.s32.totalorder %s138, %s154
      %p156 = scmp.eq.s32.totalorder %s20, 0
      %p157 = por %p155, %p156
      %p158 = scmp.le.s32.totalorder 1, %s14
      %p159 = scmp.lt.s32.totalorder %s14, 3
      %p160 = pnand %p158, %p159
      %p161 = pneg %p160
      // Predicated region
      $region9: #{block_forward.1} parent=5 // pred_check
        _
      $region10: #{block_forward.1} parent=5 // pred_check_branch
        %163 = sbr.rel (%p160) target = $region12
      $region11: #{block_forward.1} parent=5 // pred_region
        %s164 = ssub.s32 %s14, 1
        // Predicated region
        $region13: #{block_forward.1} parent=11 // pred_check
          %p165 = pneg %p61
        $region14: #{block_forward.1} parent=11 // pred_check_branch
          %167 = sbr.rel (%p165) target = $region16
        $region15: #{block_forward.1} parent=11 // pred_region
          %s169 = ssub.s32 128, 128
          %170 = vsyncadd [#allocation3], %s169
          %s172 = sshll.u32 %s1, 4
          %s173 = int_to_ptr.vmem [resolvable:$true] %s172
          %175 = dma.vmem_to_smem %s173, 128, [#allocation2], [#allocation3]
        $region16: #{block_forward.1} parent=11 // pred_fallthru
          _
        // Predicated region
        $region17: #{block_forward.1} parent=11 // pred_check
          %p176 = pneg %p82
        $region18: #{block_forward.1} parent=11 // pred_check_branch
          %178 = sbr.rel (%p176) target = $region20
        $region19: #{block_forward.1} parent=11 // pred_region
          %s180 = ssub.s32 16, 16
          %181 = vsyncadd [#allocation5], %s180
          %s183 = sshll.u32 %s2, 4
          %s184 = int_to_ptr.vmem [resolvable:$true] %s183
          %186 = dma.vmem_to_smem %s184, 16, [#allocation4], [#allocation5]
        $region20: #{block_forward.1} parent=11 // pred_fallthru
          _
        // Predicated region
        $region21: #{block_forward.1} parent=11 // pred_check
          %p187 = pneg %p103
        $region22: #{block_forward.1} parent=11 // pred_check_branch
          %189 = sbr.rel (%p187) target = $region24
        $region23: #{block_forward.1} parent=11 // pred_region
          %s191 = ssub.s32 32, 32
          %192 = vsyncadd [#allocation5], %s191
          %s194 = sshll.u32 %s3, 4
          %s195 = int_to_ptr.vmem [resolvable:$true] %s194
          %197 = dma.vmem_to_smem %s195, 32, [#allocation6], [#allocation5]
        $region24: #{block_forward.1} parent=11 // pred_fallthru
          _
        // Predicated region
        $region25: #{block_forward.1} parent=11 // pred_check
          %p198 = pneg %p124
        $region26: #{block_forward.1} parent=11 // pred_check_branch
          %200 = sbr.rel (%p198) target = $region28
        $region27: #{block_forward.1} parent=11 // pred_region
          %s202 = ssub.s32 16, 16
          %203 = vsyncadd [#allocation8], %s202
          %s205 = sshll.u32 %s4, 4
          %s206 = int_to_ptr.vmem [resolvable:$true] %s205
          %208 = dma.vmem_to_smem %s206, 16, [#allocation7], [#allocation8]
        $region28: #{block_forward.1} parent=11 // pred_fallthru
          _
      $region12: #{block_forward.1} parent=5 // pred_fallthru
        _
      %p209 = scmp.lt.s32.totalorder %s14, 2
      // Predicated region
      $region29: #{block_forward.1} parent=5 // pred_check
        %p210 = pneg %p209
      $region30: #{block_forward.1} parent=5 // pred_check_branch
        %212 = sbr.rel (%p210) target = $region32
      $region31: #{block_forward.1} parent=5 // pred_region
        // Predicated region
        $region33: #{block_forward.1} parent=31 // pred_check
          %p213 = pneg %p34
        $region34: #{block_forward.1} parent=31 // pred_check_branch
          %215 = sbr.rel (%p213) target = $region36
        $region35: #{block_forward.1} parent=31 // pred_region
          %s216 = smul.u32 4, %s14
          %p217 = scmp.lt.s32.totalorder %s216, 7
          %s218 = scalar_select %p217, %s216, 7
          %s219 = smul.addr %s218, 8
          %s220 = scalar_lea.vmem %s0, %s219
          %s221 = smul.u32 4, %s14
        $region36: #{block_forward.1} parent=31 // pred_fallthru
          _
      $region32: #{block_forward.1} parent=5 // pred_fallthru
        _
      %p222 = scmp.le.s32.totalorder 1, %s14
      %p223 = scmp.lt.s32.totalorder %s14, 3
      %p224 = pnand %p222, %p223
      %p225 = pneg %p224
      // Predicated region
      $region37: #{block_forward.1} parent=5 // pred_check
        _
      $region38: #{block_forward.1} parent=5 // pred_check_branch
        %227 = sbr.rel (%p224) target = $region40
      $region39: #{block_forward.1} parent=5 // pred_region
        %s228 = ssub.s32 %s14, 1
        // Predicated region
        $region41: #{block_forward.1} parent=39 // pred_check
          %p229 = pneg %p61
        $region42: #{block_forward.1} parent=39 // pred_check_branch
          %231 = sbr.rel (%p229) target = $region44
        $region43: #{block_forward.1} parent=39 // pred_region
          %232 = dma.done [#allocation3], 128
        $region44: #{block_forward.1} parent=39 // pred_fallthru
          _
        // Predicated region
        $region45: #{block_forward.1} parent=39 // pred_check
          %p233 = pneg %p82
        $region46: #{block_forward.1} parent=39 // pred_check_branch
          %235 = sbr.rel (%p233) target = $region48
        $region47: #{block_forward.1} parent=39 // pred_region
          %236 = dma.done [#allocation5], 16
        $region48: #{block_forward.1} parent=39 // pred_fallthru
          _
        // Predicated region
        $region49: #{block_forward.1} parent=39 // pred_check
          %p237 = pneg %p103
        $region50: #{block_forward.1} parent=39 // pred_check_branch
          %239 = sbr.rel (%p237) target = $region52
        $region51: #{block_forward.1} parent=39 // pred_region
          %240 = dma.done [#allocation5], 32
        $region52: #{block_forward.1} parent=39 // pred_fallthru
          _
        // Predicated region
        $region53: #{block_forward.1} parent=39 // pred_check
          %p241 = pneg %p124
        $region54: #{block_forward.1} parent=39 // pred_check_branch
          %243 = sbr.rel (%p241) target = $region56
        $region55: #{block_forward.1} parent=39 // pred_region
          %244 = dma.done [#allocation8], 16
        $region56: #{block_forward.1} parent=39 // pred_fallthru
          _
        %245 = sfence
        %s246 = smul.u32 4, %s19
        %p247 = scmp.lt.s32.totalorder %s246, 7
        %s248 = scalar_select %p247, %s246, 7
        %s249 = smul.addr %s248, 8
        %s250 = scalar_lea.vmem %s0, %s249
        %p251 = pneg %p40
        %p252 = pneg %p37
        %p253 = pneg %p61
        %p254 = pneg %p58
        %p255 = pneg %p82
        %p256 = pneg %p79
        %p257 = pneg %p103
        %p258 = pneg %p100
        %p259 = pneg %p124
        %p260 = pneg %p121
        %p261 = pneg %p150
        %p262 = pneg %p147
        %s263 = smul.u32 4, %s19
        %p264 = scmp.lt.s32.totalorder %s263, 7
        %s265 = scalar_select %p264, %s263, 7
        %s266 = smul.addr %s265, 8
        %s267 = scalar_lea.vmem %s5, %s266
        %s268 = smul.u32 4, %s19
        %p269 = scmp.lt.s32.totalorder %s268, 7
        %s270 = scalar_select %p269, %s268, 7
        %s271 = smul.addr %s270, 8
        %s272 = scalar_lea.vmem %s0, %s271
        %s273 = smul.u32 4, %s19
        %s274 = smul.u32 4, %s19
        %p275 = scmp.lt.s32.totalorder %s274, 7
        %s276 = scalar_select %p275, %s274, 7
        %s277 = smul.addr %s276, 8
        %s278 = scalar_lea.vmem %s5, %s277
        %s279 = smul.u32 4, %s19
        %v280 = vlaneseq
        %v281 = vand.u32 %v280, 127
        %v282 = vand.u32 %v281, 1
        %vm283 = vcmp.eq.s32.totalorder %v282, 0
        %v284 = vxor.u32 %v281, 1
        %v285 = vcvt.s32.f32 %v284
        %v286 = vcvt.s32.f32 %v281
        %287 = vrot.lane.b32.xlu0 %v286, 1
        %v288 = vpop.permute.xlu0 %287
        %vm289 = vcmp.eq.f32.partialorder %v288, %v285
        %s290 = sld [smem:[#allocation2]]
        %s291 = sld [smem:[#allocation2 + $0x201]]
        %v292 = vstv %s290
        %v293 = vstv %s291
        %v294 = vsel %vm283, %v292, %v293
        %s295 = sld [smem:[#allocation2 + $0x80]]
        %s296 = sld [smem:[#allocation2 + $0x281]]
        %v297 = vstv %s295
        %v298 = vstv %s296
        %v299 = vsel %vm283, %v297, %v298
        %s300 = sld [smem:[#allocation2 + $0x100]]
        %s301 = sld [smem:[#allocation2 + $0x301]]
        %v302 = vstv %s300
        %v303 = vstv %s301
        %v304 = vsel %vm283, %v302, %v303
        %s305 = sld [smem:[#allocation2 + $0x180]]
        %s306 = sld [smem:[#allocation2 + $0x381]]
        %v307 = vstv %s305
        %v308 = vstv %s306
        %v309 = vsel %vm283, %v307, %v308
        %s310 = sld [smem:[#allocation2 + $0x1]]
        %s311 = sld [smem:[#allocation2 + $0x200]]
        %v312 = vstv %s310
        %v313 = vstv %s311
        %v314 = vsel %vm283, %v312, %v313
        %s315 = sld [smem:[#allocation2 + $0x81]]
        %s316 = sld [smem:[#allocation2 + $0x280]]
        %v317 = vstv %s315
        %v318 = vstv %s316
        %v319 = vsel %vm283, %v317, %v318
        %s320 = sld [smem:[#allocation2 + $0x101]]
        %s321 = sld [smem:[#allocation2 + $0x300]]
        %v322 = vstv %s320
        %v323 = vstv %s321
        %v324 = vsel %vm283, %v322, %v323
        %s325 = sld [smem:[#allocation2 + $0x181]]
        %s326 = sld [smem:[#allocation2 + $0x380]]
        %v327 = vstv %s325
        %v328 = vstv %s326
        %v329 = vsel %vm283, %v327, %v328
        %s330 = sld [smem:[#allocation4]]
        %s331 = sld [smem:[#allocation4 + $0x4]]
        %v332 = vstv %s330
        %v333 = vstv %s331
        %v334 = vsel %vm283, %v332, %v333
        %s335 = sld [smem:[#allocation4 + $0x1]]
        %s336 = sld [smem:[#allocation4 + $0x5]]
        %v337 = vstv %s335
        %v338 = vstv %s336
        %v339 = vsel %vm283, %v337, %v338
        %s340 = sld [smem:[#allocation4 + $0x2]]
        %s341 = sld [smem:[#allocation4 + $0x6]]
        %v342 = vstv %s340
        %v343 = vstv %s341
        %v344 = vsel %vm283, %v342, %v343
        %s345 = sld [smem:[#allocation4 + $0x3]]
        %s346 = sld [smem:[#allocation4 + $0x7]]
        %v347 = vstv %s345
        %v348 = vstv %s346
        %v349 = vsel %vm283, %v347, %v348
        %s350 = sld [smem:[#allocation6]]
        %s351 = sld [smem:[#allocation6 + $0x84]]
        %v352 = vstv %s350
        %v353 = vstv %s351
        %v354 = vsel %vm283, %v352, %v353
        %s355 = sld [smem:[#allocation6 + $0x1]]
        %s356 = sld [smem:[#allocation6 + $0x85]]
        %v357 = vstv %s355
        %v358 = vstv %s356
        %v359 = vsel %vm283, %v357, %v358
        %s360 = sld [smem:[#allocation6 + $0x2]]
        %s361 = sld [smem:[#allocation6 + $0x86]]
        %v362 = vstv %s360
        %v363 = vstv %s361
        %v364 = vsel %vm283, %v362, %v363
        %s365 = sld [smem:[#allocation6 + $0x3]]
        %s366 = sld [smem:[#allocation6 + $0x87]]
        %v367 = vstv %s365
        %v368 = vstv %s366
        %v369 = vsel %vm283, %v367, %v368
        %s370 = sld [smem:[#allocation6 + $0x80]]
        %s371 = sld [smem:[#allocation6 + $0x4]]
        %v372 = vstv %s370
        %v373 = vstv %s371
        %v374 = vsel %vm283, %v372, %v373
        %s375 = sld [smem:[#allocation6 + $0x81]]
        %s376 = sld [smem:[#allocation6 + $0x5]]
        %v377 = vstv %s375
        %v378 = vstv %s376
        %v379 = vsel %vm283, %v377, %v378
        %s380 = sld [smem:[#allocation6 + $0x82]]
        %s381 = sld [smem:[#allocation6 + $0x6]]
        %v382 = vstv %s380
        %v383 = vstv %s381
        %v384 = vsel %vm283, %v382, %v383
        %s385 = sld [smem:[#allocation6 + $0x83]]
        %s386 = sld [smem:[#allocation6 + $0x7]]
        %v387 = vstv %s385
        %v388 = vstv %s386
        %v389 = vsel %vm283, %v387, %v388
        %s390 = sld [smem:[#allocation7]]
        %s391 = sld [smem:[#allocation7 + $0x1]]
        %v392 = vstv %s390
        %v393 = vstv %s391
        %v394 = vsel %vm283, %v392, %v393
        %v395 = vld [vmem:[%s272] sm:$0xff]
        %396 = vrot.lane.b32.xlu0 %v395, 1
        %v397 = vpop.permute.xlu0 %396
        %398 = vrot.lane.b32.xlu0 %v395, 127
        %v399 = vpop.permute.xlu0 %398
        %v400 = vsel %vm289, %v397, %v399
        %v401 = vmul.f32 %v294, %v395
        %v402 = vmul.f32 %v314, %v400
        %v403 = vadd.f32 %v401, %v402
        %v404 = vadd.f32 %v403, %v334
        %v405 = vmul.f32 %v404, 0.01
        %v406 = vmax.f32 %v404, %v405
        %v407 = vmul.f32 %v354, %v406
        %v408 = vadd.f32 %v394, %v407
        %v409 = vmul.f32 %v374, %v406
        %v410 = vmul.f32 %v299, %v395
        %v411 = vmul.f32 %v319, %v400
        %v412 = vadd.f32 %v410, %v411
        %v413 = vadd.f32 %v412, %v339
        %v414 = vmul.f32 %v413, 0.01
        %v415 = vmax.f32 %v413, %v414
        %v416 = vmul.f32 %v359, %v415
        %v417 = vadd.f32 %v408, %v416
        %v418 = vmul.f32 %v379, %v415
        %v419 = vadd.f32 %v409, %v418
        %v420 = vmul.f32 %v304, %v395
        %v421 = vmul.f32 %v324, %v400
        %v422 = vadd.f32 %v420, %v421
        %v423 = vadd.f32 %v422, %v344
        %v424 = vmul.f32 %v423, 0.01
        %v425 = vmax.f32 %v423, %v424
        %v426 = vmul.f32 %v364, %v425
        %v427 = vadd.f32 %v417, %v426
        %v428 = vmul.f32 %v384, %v425
        %v429 = vadd.f32 %v419, %v428
        %v430 = vmul.f32 %v309, %v395
        %v431 = vmul.f32 %v329, %v400
        %v432 = vadd.f32 %v430, %v431
        %v433 = vadd.f32 %v432, %v349
        %v434 = vmul.f32 %v433, 0.01
        %v435 = vmax.f32 %v433, %v434
        %v436 = vmul.f32 %v369, %v435
        %v437 = vadd.f32 %v427, %v436
        %v438 = vmul.f32 %v389, %v435
        %v439 = vadd.f32 %v429, %v438
        %440 = vrot.lane.b32.xlu0 %v439, 1
        %v441 = vpop.permute.xlu0 %440
        %442 = vrot.lane.b32.xlu0 %v439, 127
        %v443 = vpop.permute.xlu0 %442
        %v444 = vsel %vm289, %v441, %v443
        %v445 = vadd.f32 %v437, %v444
        %v446 = vmul.f32 %v445, 0.01
        %v447 = vmax.f32 %v445, %v446
        %448 = vst [vmem:[%s278] sm:$0xff] %v447
        %s449 = sadd.s32 0, 8
        %s450 = scalar_lea.vmem %s272, %s449
        %v451 = vld [vmem:[%s450] sm:$0xff]
        %452 = vrot.lane.b32.xlu0 %v451, 1
        %v453 = vpop.permute.xlu0 %452
        %454 = vrot.lane.b32.xlu0 %v451, 127
        %v455 = vpop.permute.xlu0 %454
        %v456 = vsel %vm289, %v453, %v455
        %v457 = vmul.f32 %v294, %v451
        %v458 = vmul.f32 %v314, %v456
        %v459 = vadd.f32 %v457, %v458
        %v460 = vadd.f32 %v459, %v334
        %v461 = vmul.f32 %v460, 0.01
        %v462 = vmax.f32 %v460, %v461
        %v463 = vmul.f32 %v354, %v462
        %v464 = vadd.f32 %v394, %v463
        %v465 = vmul.f32 %v374, %v462
        %v466 = vmul.f32 %v299, %v451
        %v467 = vmul.f32 %v319, %v456
        %v468 = vadd.f32 %v466, %v467
        %v469 = vadd.f32 %v468, %v339
        %v470 = vmul.f32 %v469, 0.01
        %v471 = vmax.f32 %v469, %v470
        %v472 = vmul.f32 %v359, %v471
        %v473 = vadd.f32 %v464, %v472
        %v474 = vmul.f32 %v379, %v471
        %v475 = vadd.f32 %v465, %v474
        %v476 = vmul.f32 %v304, %v451
        %v477 = vmul.f32 %v324, %v456
        %v478 = vadd.f32 %v476, %v477
        %v479 = vadd.f32 %v478, %v344
        %v480 = vmul.f32 %v479, 0.01
        %v481 = vmax.f32 %v479, %v480
        %v482 = vmul.f32 %v364, %v481
        %v483 = vadd.f32 %v473, %v482
        %v484 = vmul.f32 %v384, %v481
        %v485 = vadd.f32 %v475, %v484
        %v486 = vmul.f32 %v309, %v451
        %v487 = vmul.f32 %v329, %v456
        %v488 = vadd.f32 %v486, %v487
        %v489 = vadd.f32 %v488, %v349
        %v490 = vmul.f32 %v489, 0.01
        %v491 = vmax.f32 %v489, %v490
        %v492 = vmul.f32 %v369, %v491
        %v493 = vadd.f32 %v483, %v492
        %v494 = vmul.f32 %v389, %v491
        %v495 = vadd.f32 %v485, %v494
        %496 = vrot.lane.b32.xlu0 %v495, 1
        %v497 = vpop.permute.xlu0 %496
        %498 = vrot.lane.b32.xlu0 %v495, 127
        %v499 = vpop.permute.xlu0 %498
        %v500 = vsel %vm289, %v497, %v499
        %v501 = vadd.f32 %v493, %v500
        %v502 = vmul.f32 %v501, 0.01
        %v503 = vmax.f32 %v501, %v502
        %s504 = scalar_lea.vmem %s278, %s449
        %505 = vst [vmem:[%s504] sm:$0xff] %v503
        %s506 = sadd.s32 0, 16
        %s507 = scalar_lea.vmem %s272, %s506
        %v508 = vld [vmem:[%s507] sm:$0xff]
        %509 = vrot.lane.b32.xlu0 %v508, 1
        %v510 = vpop.permute.xlu0 %509
        %511 = vrot.lane.b32.xlu0 %v508, 127
        %v512 = vpop.permute.xlu0 %511
        %v513 = vsel %vm289, %v510, %v512
        %v514 = vmul.f32 %v294, %v508
        %v515 = vmul.f32 %v314, %v513
        %v516 = vadd.f32 %v514, %v515
        %v517 = vadd.f32 %v516, %v334
        %v518 = vmul.f32 %v517, 0.01
        %v519 = vmax.f32 %v517, %v518
        %v520 = vmul.f32 %v354, %v519
        %v521 = vadd.f32 %v394, %v520
        %v522 = vmul.f32 %v374, %v519
        %v523 = vmul.f32 %v299, %v508
        %v524 = vmul.f32 %v319, %v513
        %v525 = vadd.f32 %v523, %v524
        %v526 = vadd.f32 %v525, %v339
        %v527 = vmul.f32 %v526, 0.01
        %v528 = vmax.f32 %v526, %v527
        %v529 = vmul.f32 %v359, %v528
        %v530 = vadd.f32 %v521, %v529
        %v531 = vmul.f32 %v379, %v528
        %v532 = vadd.f32 %v522, %v531
        %v533 = vmul.f32 %v304, %v508
        %v534 = vmul.f32 %v324, %v513
        %v535 = vadd.f32 %v533, %v534
        %v536 = vadd.f32 %v535, %v344
        %v537 = vmul.f32 %v536, 0.01
        %v538 = vmax.f32 %v536, %v537
        %v539 = vmul.f32 %v364, %v538
        %v540 = vadd.f32 %v530, %v539
        %v541 = vmul.f32 %v384, %v538
        %v542 = vadd.f32 %v532, %v541
        %v543 = vmul.f32 %v309, %v508
        %v544 = vmul.f32 %v329, %v513
        %v545 = vadd.f32 %v543, %v544
        %v546 = vadd.f32 %v545, %v349
        %v547 = vmul.f32 %v546, 0.01
        %v548 = vmax.f32 %v546, %v547
        %v549 = vmul.f32 %v369, %v548
        %v550 = vadd.f32 %v540, %v549
        %v551 = vmul.f32 %v389, %v548
        %v552 = vadd.f32 %v542, %v551
        %553 = vrot.lane.b32.xlu0 %v552, 1
        %v554 = vpop.permute.xlu0 %553
        %555 = vrot.lane.b32.xlu0 %v552, 127
        %v556 = vpop.permute.xlu0 %555
        %v557 = vsel %vm289, %v554, %v556
        %v558 = vadd.f32 %v550, %v557
        %v559 = vmul.f32 %v558, 0.01
        %v560 = vmax.f32 %v558, %v559
        %s561 = scalar_lea.vmem %s278, %s506
        %562 = vst [vmem:[%s561] sm:$0xff] %v560
        %s563 = sadd.s32 0, 24
        %s564 = scalar_lea.vmem %s272, %s563
        %v565 = vld [vmem:[%s564] sm:$0xff]
        %566 = vrot.lane.b32.xlu0 %v565, 1
        %v567 = vpop.permute.xlu0 %566
        %568 = vrot.lane.b32.xlu0 %v565, 127
        %v569 = vpop.permute.xlu0 %568
        %v570 = vsel %vm289, %v567, %v569
        %v571 = vmul.f32 %v294, %v565
        %v572 = vmul.f32 %v314, %v570
        %v573 = vadd.f32 %v571, %v572
        %v574 = vadd.f32 %v573, %v334
        %v575 = vmul.f32 %v574, 0.01
        %v576 = vmax.f32 %v574, %v575
        %v577 = vmul.f32 %v354, %v576
        %v578 = vadd.f32 %v394, %v577
        %v579 = vmul.f32 %v374, %v576
        %v580 = vmul.f32 %v299, %v565
        %v581 = vmul.f32 %v319, %v570
        %v582 = vadd.f32 %v580, %v581
        %v583 = vadd.f32 %v582, %v339
        %v584 = vmul.f32 %v583, 0.01
        %v585 = vmax.f32 %v583, %v584
        %v586 = vmul.f32 %v359, %v585
        %v587 = vadd.f32 %v578, %v586
        %v588 = vmul.f32 %v379, %v585
        %v589 = vadd.f32 %v579, %v588
        %v590 = vmul.f32 %v304, %v565
        %v591 = vmul.f32 %v324, %v570
        %v592 = vadd.f32 %v590, %v591
        %v593 = vadd.f32 %v592, %v344
        %v594 = vmul.f32 %v593, 0.01
        %v595 = vmax.f32 %v593, %v594
        %v596 = vmul.f32 %v364, %v595
        %v597 = vadd.f32 %v587, %v596
        %v598 = vmul.f32 %v384, %v595
        %v599 = vadd.f32 %v589, %v598
        %v600 = vmul.f32 %v309, %v565
        %v601 = vmul.f32 %v329, %v570
        %v602 = vadd.f32 %v600, %v601
        %v603 = vadd.f32 %v602, %v349
        %v604 = vmul.f32 %v603, 0.01
        %v605 = vmax.f32 %v603, %v604
        %v606 = vmul.f32 %v369, %v605
        %v607 = vadd.f32 %v597, %v606
        %v608 = vmul.f32 %v389, %v605
        %v609 = vadd.f32 %v599, %v608
        %610 = vrot.lane.b32.xlu0 %v609, 1
        %v611 = vpop.permute.xlu0 %610
        %612 = vrot.lane.b32.xlu0 %v609, 127
        %v613 = vpop.permute.xlu0 %612
        %v614 = vsel %vm289, %v611, %v613
        %v615 = vadd.f32 %v607, %v614
        %v616 = vmul.f32 %v615, 0.01
        %v617 = vmax.f32 %v615, %v616
        %s618 = scalar_lea.vmem %s278, %s563
        %619 = vst [vmem:[%s618] sm:$0xff] %v617
        %s620 = smul.u32 4, %s19
        %p621 = scmp.lt.s32.totalorder %s620, 7
        %s622 = scalar_select %p621, %s620, 7
        %s623 = smul.addr %s622, 8
        %s624 = scalar_lea.vmem %s5, %s623
        // Predicated region
        $region57: #{block_forward.1} parent=39 // pred_check
          %p625 = pneg %p147
        $region58: #{block_forward.1} parent=39 // pred_check_branch
          %627 = sbr.rel (%p625) target = $region60
        $region59: #{block_forward.1} parent=39 // pred_region
          %s628 = smul.u32 4, %s19
        $region60: #{block_forward.1} parent=39 // pred_fallthru
          _
      $region40: #{block_forward.1} parent=5 // pred_fallthru
        _
      %p629 = scmp.le.s32.totalorder 2, %s14
      // Predicated region
      $region61: #{block_forward.1} parent=5 // pred_check
        %p630 = pneg %p629
      $region62: #{block_forward.1} parent=5 // pred_check_branch
        %632 = sbr.rel (%p630) target = $region64
      $region63: #{block_forward.1} parent=5 // pred_region
        %s633 = ssub.s32 %s14, 2
        // Predicated region
        $region65: #{block_forward.1} parent=63 // pred_check
          %p634 = pneg %p153
        $region66: #{block_forward.1} parent=63 // pred_check_branch
          %636 = sbr.rel (%p634) target = $region68
        $region67: #{block_forward.1} parent=63 // pred_region
          %s637 = smul.u32 4, %s20
          %p638 = scmp.lt.s32.totalorder %s637, 7
          %s639 = scalar_select %p638, %s637, 7
          %s640 = smul.addr %s639, 8
          %s641 = scalar_lea.vmem %s5, %s640
        $region68: #{block_forward.1} parent=63 // pred_fallthru
          _
      $region64: #{block_forward.1} parent=5 // pred_fallthru
        _
    $region6: #{block_forward.1} parent=1 // loop_footer
      %s18 = sadd.s32 1, %s14
    $region7: #{block_forward.1} parent=1 // loop_footer_branch
      %13 = sbr.rel target = $region3
    $region8: #{block_forward.1} parent=1 // loop_exit
      _
    %642 = vsyncpa [#allocation3], 1
    %s643 = scalar_lea.sflag [#allocation3], 1
    %644 = vsyncpa %s643, 1
    %645 = vsyncpa [#allocation5], 1
    %646 = vsyncpa [#allocation8], 1

</llo_original>
